<compile_context>
chip_gen: v5e
topology: v5e:2x2
jax: 0.10.0
libtpu: 0.0.40
codegen_flags: <defaults>
</compile_context>

<pallas_src>
import jax
import jax.numpy as jnp
from jax import lax
from jax.experimental import pallas as pl
from jax.experimental.pallas import tpu as pltpu


def _round_up(x, m):
    return ((x + m - 1) // m) * m


def pooler_kernel(x_ref, w_ref, b_ref, o_ref):
    # x_ref: (TM, Hp)    w_ref: (Hp, TN)  -- pre-transposed [K, N] layout
    # b_ref: (1,  TN)    o_ref: (TM, TN)
    y = lax.dot_general(
        x_ref[...], w_ref[...],
        dimension_numbers=(((1,), (0,)), ((), ())),   # plain x @ W on the MXU
        preferred_element_type=jnp.float32,
    )
    y = y + b_ref[...].astype(jnp.float32)            # VPU broadcast add (f32)
    o_ref[...] = jnp.tanh(y).astype(o_ref.dtype)      # EUP tanh, downcast on store


def pooler_forward(hidden_states, weight, bias, *, block_m=1024,
                   compute_dtype=None, out_dtype=None):
    """hidden_states: [..., H]; weight: [H_out, H_in] (PyTorch layout); bias: [H_out].

    compute_dtype: dtype fed to the MXU (cast once in the wrapper).  Pass
      jnp.bfloat16 for the fast path on all generations (accumulation stays f32).
    out_dtype: output dtype (defaults to the input dtype).
    """
    orig_shape = hidden_states.shape
    H = orig_shape[-1]
    if compute_dtype is None:
        compute_dtype = hidden_states.dtype
    if out_dtype is None:
        out_dtype = hidden_states.dtype

    # One-time HBM-side transpose + cast of the grid-invariant weight.
    x2d = hidden_states.reshape(-1, H).astype(compute_dtype)   # (M, H)
    w_t = weight.T.astype(compute_dtype)                       # (K=H_in, N=H_out)
    M = x2d.shape[0]

    # ---- lane/sublane aligned sizes -----------------------------------------
    Hp = max(_round_up(H, 128), 128)
    M8 = max(_round_up(M, 8), 8)

    # Row tile: spread M over the minimal number of tiles so the M pad is < TM
    # (avoids the full extra HBM read+write of the activation slab the old
    # TM = min(block_m, M8) could trigger).
    block_m = max(int(block_m), 8)
    n_row_tiles = pl.cdiv(M8, block_m)
    TM = _round_up(pl.cdiv(M8, n_row_tiles), 8)

    # ---- per-generation VMEM budget ------------------------------------------
    cbytes = jnp.dtype(compute_dtype).itemsize
    obytes = jnp.dtype(out_dtype).itemsize
    try:
        vmem_cap = int(pltpu.get_tpu_info().vmem_capacity_bytes)
    except Exception:
        vmem_cap = 64 << 20                      # conservative (v7x) fallback
    vmem_budget = int(0.8 * vmem_cap)            # leave headroom for Mosaic scratch

    # Single-buffer the invariant weight/bias only when it actually pays
    # (keeps the tiny-H path identical to the known-good default pipeline).
    SB_THRESHOLD = 2 << 20

    def _w_bufs(tn):
        return 1 if (tn == Hp and Hp * tn * cbytes >= SB_THRESHOLD) else 2

    def _usage(tm, tn):
        return (_w_bufs(tn) * Hp * tn * cbytes    # weight block(s), VMEM-resident
                + 2 * tm * Hp * cbytes            # x tile, double-buffered
                + 2 * tm * tn * obytes            # out tile, double-buffered
                + 2 * tn * 4)                     # bias (f32)

    # N-tile the weight if (Hp, Hp) residency doesn't fit (matters on v7x / big H).
    TN = Hp
    probe = 1
    while TN > 128 and _usage(TM, TN) > vmem_budget:
        probe += 1
        TN = max(128, _round_up(pl.cdiv(Hp, probe), 128))
    grid_n = pl.cdiv(Hp, TN)
    Np = grid_n * TN
    # If even the narrowest N tile doesn't fit, shrink the row tile too.
    while TM > 8 and _usage(TM, TN) > vmem_budget:
        TM = max(8, _round_up(TM // 2, 8))
    grid_m = pl.cdiv(M8, TM)
    Mp = grid_m * TM
    # TODO(synk): for pathological H where even (Hp,128)+(8,Hp) tiles exceed VMEM,
    # add a K grid axis with a VMEM f32 accumulator and pl.when init/finalize.

    usage = _usage(TM, TN)
    vmem_limit = int(min(vmem_budget, max(usage + (8 << 20), 32 << 20)))

    # ---- padding (zero-pad; padded lanes give tanh(0)=0 and are sliced off) ---
    if (Mp, Hp) != (M, H):
        x2d = jnp.pad(x2d, ((0, Mp - M), (0, Hp - H)))
    if (Hp, Np) != (H, H):
        w_t = jnp.pad(w_t, ((0, Hp - H), (0, Np - H)))
        b = jnp.pad(bias, (0, Np - H))
    else:
        b = bias
    b2d = b.reshape(1, Np).astype(jnp.float32)    # bias stays f32 for the f32 add

    single_buffer_w = (grid_n == 1) and (Hp * TN * cbytes >= SB_THRESHOLD)
    w_mode = dict(pipeline_mode=pl.Buffered(1)) if single_buffer_w else {}

    grid = (grid_n, grid_m)   # M is the inner (fast) axis -> weight resident per N tile

    out = pl.pallas_call(
        pooler_kernel,
        out_shape=jax.ShapeDtypeStruct((Mp, Np), out_dtype),
        grid=grid,
        in_specs=[
            pl.BlockSpec((TM, Hp), lambda j, i: (i, 0)),            # x streams over M
            pl.BlockSpec((Hp, TN), lambda j, i: (0, j), **w_mode),  # weight block
            pl.BlockSpec((1, TN), lambda j, i: (0, j), **w_mode),   # bias block
        ],
        out_specs=pl.BlockSpec((TM, TN), lambda j, i: (i, j)),
        compiler_params=pltpu.CompilerParams(
            # Both axes independent (K is never split).  On v7x, profile whether
            # the M axis actually shards across both TensorCores; if not, switch
            # to CORE_PARALLEL on a leading core axis.
            dimension_semantics=("parallel", "parallel"),
            vmem_limit_bytes=vmem_limit,
        ),
    )(x2d, w_t, b2d)

    if (Mp, Np) != (M, H):
        out = out[:M, :H]
    return out.reshape(orig_shape)


if __name__ == "__main__":
    batch, seq, hidden = 2, 8, 32

    key = jax.random.PRNGKey(0)
    k_x, k_w, k_b = jax.random.split(key, 3)

    # Deterministic synthetic params (matching nn.Linear(hidden, hidden) shapes).
    hidden_states = jax.random.normal(k_x, (batch, seq, hidden), dtype=jnp.float32)
    weight = jax.random.normal(k_w, (hidden, hidden), dtype=jnp.float32) * 0.05
    bias = jax.random.normal(k_b, (hidden,), dtype=jnp.float32) * 0.05

    # Reference in plain JAX (same math as torch: x @ W^T + b, then tanh).
    ref = jnp.tanh(jnp.einsum("bsh,oh->bso", hidden_states, weight) + bias)

    # f32 path (strict correctness check).
    out = jax.block_until_ready(pooler_forward(hidden_states, weight, bias))
    assert out.shape == hidden_states.shape
    assert jnp.allclose(out, ref, atol=1e-5, rtol=1e-5)

    # bf16 compute path (recommended fast path on v5e/v6e/v7x; f32 accumulation).
    out_bf16 = jax.block_until_ready(
        pooler_forward(hidden_states, weight, bias, compute_dtype=jnp.bfloat16))
    assert out_bf16.shape == hidden_states.shape
    assert jnp.allclose(out_bf16.astype(jnp.float32), ref, atol=3e-2, rtol=3e-2)

    print("KERNEL_OK")
</pallas_src>

<mosaic_0001>
module attributes {stable_mosaic.version = 11 : i64} {
  func.func @pooler_kernel(%arg0: i32, %arg1: i32, %arg2: memref<16x128xf32, #tpu.memory_space<vmem>>, %arg3: memref<128x128xf32, #tpu.memory_space<vmem>>, %arg4: memref<1x128xf32, #tpu.memory_space<vmem>>, %arg5: memref<16x128xf32, #tpu.memory_space<vmem>>) attributes {dimension_semantics = [#tpu.dimension_semantics<parallel>, #tpu.dimension_semantics<parallel>], iteration_bounds = array<i64: 1, 1>, scalar_prefetch = 0 : i64, scratch_operands = 0 : i64, tpu.core_type = #tpu.core_type<tc>, window_params = [{transform_indices = @transform_0, window_bounds = array<i64: 16, 128>}, {transform_indices = @transform_1, window_bounds = array<i64: 128, 128>}, {transform_indices = @transform_2, window_bounds = array<i64: 1, 128>}, {transform_indices = @transform_3, window_bounds = array<i64: 16, 128>}]} {
    %c0 = arith.constant 0 : index
    %c0_0 = arith.constant 0 : index
    %0 = vector.load %arg2[%c0, %c0_0] : memref<16x128xf32, #tpu.memory_space<vmem>>, vector<16x128xf32>
    %c0_1 = arith.constant 0 : index
    %c0_2 = arith.constant 0 : index
    %1 = vector.load %arg3[%c0_1, %c0_2] : memref<128x128xf32, #tpu.memory_space<vmem>>, vector<128x128xf32>
    %cst = arith.constant dense<0.000000e+00> : vector<16x128xf32>
    %2 = tpu.matmul %0, %1, %cst {dimension_numbers = #tpu.dot_dimension_numbers<[1], [0], [0], [1], [0, 0, 1, 1], [], []>} : vector<16x128xf32>, vector<128x128xf32>, vector<16x128xf32> -> vector<16x128xf32>
    %c0_3 = arith.constant 0 : index
    %c0_4 = arith.constant 0 : index
    %3 = vector.load %arg4[%c0_3, %c0_4] : memref<1x128xf32, #tpu.memory_space<vmem>>, vector<1x128xf32>
    %4 = vector.broadcast %3 : vector<1x128xf32> to vector<16x128xf32>
    %5 = arith.addf %2, %4 : vector<16x128xf32>
    %6 = math.tanh %5 : vector<16x128xf32>
    %c0_5 = arith.constant 0 : index
    %c0_6 = arith.constant 0 : index
    %7 = vector.load %arg5[%c0_5, %c0_6] : memref<16x128xf32, #tpu.memory_space<vmem>>, vector<16x128xf32>
    tpu.vector_store %arg5[%c0_5, %c0_6], %6 {strides = array<i32>} : memref<16x128xf32, #tpu.memory_space<vmem>>, vector<16x128xf32>,
    return
  }
  func.func @transform_0(%arg0: i32, %arg1: i32) -> (i32, i32) {
    %c0_i32 = arith.constant 0 : i32
    %c0_i32_0 = arith.constant 0 : i32
    return %arg1, %c0_i32 : i32, i32
  }
  func.func @transform_1(%arg0: i32, %arg1: i32) -> (i32, i32) {
    %c0_i32 = arith.constant 0 : i32
    %c0_i32_0 = arith.constant 0 : i32
    return %c0_i32, %arg0 : i32, i32
  }
  func.func @transform_2(%arg0: i32, %arg1: i32) -> (i32, i32) {
    %c0_i32 = arith.constant 0 : i32
    %c0_i32_0 = arith.constant 0 : i32
    return %c0_i32, %arg0 : i32, i32
  }
  func.func @transform_3(%arg0: i32, %arg1: i32) -> (i32, i32) {
    %c0_i32 = arith.constant 0 : i32
    return %arg1, %arg0 : i32, i32
  }
}

</mosaic_0001>

<llo_original>
// kernel: tpu_custom_call.1
$region0: #{tpu_custom_call.1}
  #allocation0 [shape = 'u32[]', space=smem, size = 0x4, offset = 0x4, fixed_abs, tag = 'smem constant byte address 0x4 - core index']
  #allocation1 [shape = 'u32[72,128]{1,0:T(1,128)}', space=vmem, size = 0x9000, scoped, tag = 'internal scratch']
  %s0 = inlined_call_operand.hbm [shape: f32[16,128], index: 0, kind: input, shape index: {}]
  %s1 = inlined_call_operand.hbm [shape: f32[128,128], index: 1, kind: input, shape index: {}]
  %s2 = inlined_call_operand.vmem [shape: f32[1,128], index: 2, kind: input, shape index: {}]
  %s3 = inlined_call_operand.hbm [shape: f32[16,128], index: 3, kind: output, shape index: {}]
  %s4 = sld [smem:[#allocation0]]
  $region30: #{tpu_custom_call.1} parent=0
    _
  %s6 = ssub.s32 1, %s4
  %s7 = scalar_select 0, %s6, %s4
  $region1: #{tpu_custom_call.1} parent=0
    #allocation2 [shape = 'u8[8192]{0}', space=vmem, size = 0x2000, scoped, tag = 'input window, operand 0, single buffered']
    #allocation3 [shape = 's32[1]{0}', space=sflag, size = 0x4, scoped, tag = 'scoped memory for tpu_custom_call.1']
    #allocation4 [shape = 's32[1]{0}', space=sflag, size = 0x4, scoped, tag = 'scoped memory for tpu_custom_call.1']
    #allocation5 [shape = 'u8[65536]{0}', space=vmem, size = 0x10000, scoped, tag = 'input window, operand 1, single buffered']
    #allocation6 [shape = 's32[1]{0}', space=sflag, size = 0x4, scoped, tag = 'scoped memory for tpu_custom_call.1']
    #allocation7 [shape = 'u8[8192]{0}', space=vmem, size = 0x2000, scoped, tag = 'output window, operand 0, single buffered']
    %8 = vsyncpa [#allocation3], 0
    %9 = vsyncpa [#allocation6], 0
    %10 = vsyncpa [#allocation4], 0
    // Predicated region
    $region2: #{tpu_custom_call.1} parent=1 // pred_check
      _
    $region3: #{tpu_custom_call.1} parent=1 // pred_check_branch
      %12 = sbr.rel (0) target = $region5
    $region4: #{tpu_custom_call.1} parent=1 // pred_region
      %14 = vsyncadd [#allocation3], 0
      %s15 = sshll.u32 %s0, 4
      %s16 = int_to_ptr.hbm [resolvable:$true] %s15
      %s17 = sshll.u32 [#allocation2], 4
      %s18 = int_to_ptr.vmem [resolvable:$true] %s17
      %23 = dma.hbm_to_vmem [thread:$0]  %s16, 256, %s18, [#allocation3], 128, 128, 8
    $region5: #{tpu_custom_call.1} parent=1 // pred_fallthru
      _
    // Predicated region
    $region6: #{tpu_custom_call.1} parent=1 // pred_check
      _
    $region7: #{tpu_custom_call.1} parent=1 // pred_check_branch
      %25 = sbr.rel (0) target = $region9
    $region8: #{tpu_custom_call.1} parent=1 // pred_region
      %27 = vsyncadd [#allocation6], 0
      %s28 = sshll.u32 %s1, 4
      %s29 = int_to_ptr.hbm [resolvable:$true] %s28
      %s30 = sshll.u32 [#allocation5], 4
      %s31 = int_to_ptr.vmem [resolvable:$true] %s30
      %36 = dma.hbm_to_vmem [thread:$0]  %s29, 2048, %s31, [#allocation6], 128, 128, 8
    $region9: #{tpu_custom_call.1} parent=1 // pred_fallthru
      _
    // Predicated region
    $region10: #{tpu_custom_call.1} parent=1 // pred_check
      _
    $region11: #{tpu_custom_call.1} parent=1 // pred_check_branch
      %38 = sbr.rel (0) target = $region13
    $region12: #{tpu_custom_call.1} parent=1 // pred_region
      _
    $region13: #{tpu_custom_call.1} parent=1 // pred_fallthru
      _
    // Predicated region
    $region14: #{tpu_custom_call.1} parent=1 // pred_check
      _
    $region15: #{tpu_custom_call.1} parent=1 // pred_check_branch
      %40 = sbr.rel (0) target = $region17
    $region16: #{tpu_custom_call.1} parent=1 // pred_region
      %42 = dma.done [#allocation3], 256
    $region17: #{tpu_custom_call.1} parent=1 // pred_fallthru
      _
    // Predicated region
    $region18: #{tpu_custom_call.1} parent=1 // pred_check
      _
    $region19: #{tpu_custom_call.1} parent=1 // pred_check_branch
      %44 = sbr.rel (0) target = $region21
    $region20: #{tpu_custom_call.1} parent=1 // pred_region
      %46 = dma.done [#allocation6], 2048
    $region21: #{tpu_custom_call.1} parent=1 // pred_fallthru
      _
    %v47 = vld [vmem:[#allocation2] sm:$0xff]
    %v48 = vld [vmem:[#allocation2 + $0x8] sm:$0xff]
    %v49 = vld [vmem:[#allocation5] sm:$0xff]
    %v50 = vld [vmem:[#allocation5 + $0x8] sm:$0xff]
    %v51 = vld [vmem:[#allocation5 + $0x10] sm:$0xff]
    %v52 = vld [vmem:[#allocation5 + $0x18] sm:$0xff]
    %v53 = vld [vmem:[#allocation5 + $0x20] sm:$0xff]
    %v54 = vld [vmem:[#allocation5 + $0x28] sm:$0xff]
    %v55 = vld [vmem:[#allocation5 + $0x30] sm:$0xff]
    %v56 = vld [vmem:[#allocation5 + $0x38] sm:$0xff]
    %v57 = vld [vmem:[#allocation5 + $0x40] sm:$0xff]
    %v58 = vld [vmem:[#allocation5 + $0x48] sm:$0xff]
    %v59 = vld [vmem:[#allocation5 + $0x50] sm:$0xff]
    %v60 = vld [vmem:[#allocation5 + $0x58] sm:$0xff]
    %v61 = vld [vmem:[#allocation5 + $0x60] sm:$0xff]
    %v62 = vld [vmem:[#allocation5 + $0x68] sm:$0xff]
    %v63 = vld [vmem:[#allocation5 + $0x70] sm:$0xff]
    %v64 = vld [vmem:[#allocation5 + $0x78] sm:$0xff]
    %v65 = vld [vmem:[%s2] sm:$0x1]
    %v67 = vperm.slane %v65, 0
    %69 = vmatpush.msra.mxu0 %v64
    %70 = vmatpush.msra.mxu0 %v63
    %71 = vmatpush.msra.mxu0 %v62
    %72 = vmatpush.msra.mxu0 %v61
    %73 = vmatpush.msra.mxu0 %v60
    %74 = vmatpush.msra.mxu0 %v59
    %75 = vmatpush.msra.mxu0 %v58
    %76 = vmatpush.msra.mxu0 %v57
    %77 = vmatpush.msra.mxu0 %v56
    %78 = vmatpush.msra.mxu0 %v55
    %79 = vmatpush.msra.mxu0 %v54
    %80 = vmatpush.msra.mxu0 %v53
    %81 = vmatpush.msra.mxu0 %v52
    %82 = vmatpush.msra.mxu0 %v51
    %83 = vmatpush.msra.mxu0 %v50
    %84 = vmatpush.msra.mxu0 %v49
    %85 = vmatmul.f32.gmra.mxu0 %v47
    %v86 = vpop.f32.mrf.mxu0
    %v87 = vadd.f32 %v67, %v86
    %88 = vmatmul.f32.gmra.mxu0 %v48
    %v89 = vpop.f32.mrf.mxu0
    %v90 = vadd.f32 %v67, %v89
    %91 = vdwg.mxu0
    %v92 = vtanh.pop %v87
    %v93 = vtanh.pop %v90
    %94 = vst [vmem:[#allocation7] sm:$0xff] %v92
    %95 = vst [vmem:[#allocation7 + $0x8] sm:$0xff] %v93
    // Predicated region
    $region22: #{tpu_custom_call.1} parent=1 // pred_check
      _
    $region23: #{tpu_custom_call.1} parent=1 // pred_check_branch
      %97 = sbr.rel (0) target = $region25
    $region24: #{tpu_custom_call.1} parent=1 // pred_region
      %99 = vsyncadd [#allocation4], 0
      %s100 = sshll.u32 [#allocation7], 4
      %s101 = int_to_ptr.vmem [resolvable:$true] %s100
      %s102 = sshll.u32 %s3, 4
      %s103 = int_to_ptr.hbm [resolvable:$true] %s102
      %108 = dma.vmem_to_hbm [thread:$0]  %s101, 256, %s103, [#allocation4], 128, 128, 8
    $region25: #{tpu_custom_call.1} parent=1 // pred_fallthru
      _
    // Predicated region
    $region26: #{tpu_custom_call.1} parent=1 // pred_check
      _
    $region27: #{tpu_custom_call.1} parent=1 // pred_check_branch
      %110 = sbr.rel (0) target = $region29
    $region28: #{tpu_custom_call.1} parent=1 // pred_region
      %112 = dma.done [#allocation4], 256
    $region29: #{tpu_custom_call.1} parent=1 // pred_fallthru
      _
    %113 = vsyncpa [#allocation3], 1
    %114 = vsyncpa [#allocation6], 1
    %115 = vsyncpa [#allocation4], 1

</llo_original>
